<compile_context>
chip_gen: v5e
topology: v5e:2x2
jax: 0.10.0
libtpu: 0.0.40
codegen_flags: <defaults>
</compile_context>

<pallas_src>
import jax
import jax.numpy as jnp
from jax.experimental import pallas as pl
from jax.experimental.pallas import tpu as pltpu  # noqa: F401

# ----- problem constants (from the PyTorch module) -----
N, C_IN, H, W = 1, 5, 7, 7
C_OUT, KH, KW = 9, 7, 7
PAD_H, PAD_W = 3, 0
H_OUT = H + 2 * PAD_H - KH + 1   # 7
W_OUT = W + 2 * PAD_W - KW + 1   # 1
EPS = 1e-5

H_PADDED = H + 2 * PAD_H         # 13 padded-image rows
K_ROW = C_IN * KW                # 35 = one padded-image row flattened over (c, kw)

# padded tile sizes used by the kernel
M_PAD = 8      # >= H_OUT (row 7 is junk, excluded from stats and sliced off)
R_PAD = 16     # >= H_PADDED
K_PAD = 128    # lane-pad of K_ROW
N_PAD = 16     # >= C_OUT


def _fused_kernel(x_ref, w_ref, p_ref, o_ref):
    """Conv (7 shifted matmuls) + bias + bn1∘bn2 (analytically folded) + residual add."""
    # ----- convolution: out[h, oc] = sum_kh  X2[h+kh, :] @ W[kh]  -----
    conv = jnp.dot(x_ref[pl.ds(0, M_PAD), :], w_ref[0],
                   preferred_element_type=jnp.float32)
    for kh in range(1, KH):                          # static, unrolled at trace time
        conv = conv + jnp.dot(x_ref[pl.ds(kh, M_PAD), :], w_ref[kh],
                              preferred_element_type=jnp.float32)

    p = p_ref[...]                                   # (8, N_PAD) packed per-channel params
    bias = p[0:1, :]
    g1 = p[1:2, :]
    g2 = p[3:4, :]
    be2 = p[4:5, :]
    conv = conv + bias                               # (M_PAD, N_PAD)

    # ----- batch statistics of conv over the H_OUT valid rows (count = N*H_out*W_out = 7) -----
    c_valid = conv[0:H_OUT, :]                       # static slice, no mask needed
    inv_cnt = jnp.float32(1.0 / H_OUT)
    mean1 = jnp.sum(c_valid, axis=0, keepdims=True) * inv_cnt
    d = c_valid - mean1
    var1 = jnp.sum(d * d, axis=0, keepdims=True) * inv_cnt   # biased variance (training mode)
    r1 = jax.lax.rsqrt(var1 + EPS)

    # ----- bn2 folded into bn1 -----
    # a = g1*(conv-mean1)*r1 + be1  =>  mean(a) = be1,  var(a) = g1^2*var1/(var1+eps)
    # b = g2*(a - be1)*r2 + be2     =  g1*g2*r1*r2*(conv - mean1) + be2
    var2 = (g1 * g1) * var1 * (r1 * r1)
    r2 = jax.lax.rsqrt(var2 + EPS)
    scale = g1 * g2 * r1 * r2                        # (1, N_PAD)

    # output = b + conv
    o_ref[...] = conv * (1.0 + scale) + (be2 - scale * mean1)


@jax.jit
def model_forward(x, conv_w, conv_b, g1, be1, g2, be2):
    """x: (1, 5, 7, 7) NCHW float32. Returns (1, 9, 7, 1) float32."""
    x = x.astype(jnp.float32)

    # H-padded image, rows flattened over (c, kw): X2[r, c*KW + kw] = x_pad[c, r, kw]
    xp = jnp.pad(x, ((0, 0), (0, 0), (PAD_H, PAD_H), (PAD_W, PAD_W)))
    x2 = jnp.transpose(xp[0], (1, 0, 2)).reshape(H_PADDED, K_ROW)        # (13, 35)
    x2 = jnp.pad(x2, ((0, R_PAD - H_PADDED), (0, K_PAD - K_ROW)))        # (16, 128)

    # per-tap weight: Wk[kh, c*KW+kw, oc] = conv_w[oc, c, kh, kw]
    w = jnp.transpose(conv_w, (2, 1, 3, 0)).reshape(KH, K_ROW, C_OUT)    # (7, 35, 9)
    w = jnp.pad(w, ((0, 0), (0, K_PAD - K_ROW), (0, N_PAD - C_OUT)))     # (7, 128, 16)

    # all per-channel params in one tile -> single DMA
    params = jnp.pad(
        jnp.stack([conv_b, g1, be1, g2, be2], axis=0).astype(jnp.float32),
        ((0, 8 - 5), (0, N_PAD - C_OUT)))                                # (8, 16)

    out_pad = pl.pallas_call(
        _fused_kernel,
        out_shape=jax.ShapeDtypeStruct((M_PAD, N_PAD), jnp.float32),
        in_specs=[
            pl.BlockSpec((R_PAD, K_PAD), lambda: (0, 0)),
            pl.BlockSpec((KH, K_PAD, N_PAD), lambda: (0, 0, 0)),
            pl.BlockSpec((8, N_PAD), lambda: (0, 0)),
        ],
        out_specs=pl.BlockSpec((M_PAD, N_PAD), lambda: (0, 0)),
    )(x2, w, params)

    out = out_pad[:H_OUT, :C_OUT]                     # (7, 9)  rows=H_out, cols=C_out
    return out.T.reshape(N, C_OUT, H_OUT, W_OUT)      # NCHW (1, 9, 7, 1)


@jax.jit
def _reference(x, conv_w, conv_b, g1, be1, g2, be2):
    """Pure-JAX reference of the PyTorch forward (training-mode BN)."""
    conv = jax.lax.conv_general_dilated(
        x, conv_w, window_strides=(1, 1),
        padding=((PAD_H, PAD_H), (PAD_W, PAD_W)),
        dimension_numbers=("NCHW", "OIHW", "NCHW")) + conv_b.reshape(1, -1, 1, 1)

    def bn(t, g, b):
        m = jnp.mean(t, axis=(0, 2, 3), keepdims=True)
        v = jnp.mean((t - m) ** 2, axis=(0, 2, 3), keepdims=True)
        return (t - m) * jax.lax.rsqrt(v + EPS) * g.reshape(1, -1, 1, 1) + b.reshape(1, -1, 1, 1)

    a = bn(conv, g1, be1)
    b = bn(a, g2, be2)
    return b + conv


if __name__ == "__main__":
    key = jax.random.PRNGKey(0)
    kx, kw_, kb = jax.random.split(key, 3)

    x = jax.random.normal(kx, (N, C_IN, H, W), dtype=jnp.float32)

    # deterministic parameter init (PyTorch-like uniform for conv, defaults for BN)
    fan_in = C_IN * KH * KW
    bound = 1.0 / (fan_in ** 0.5)
    conv_w = jax.random.uniform(kw_, (C_OUT, C_IN, KH, KW), jnp.float32, -bound, bound)
    conv_b = jax.random.uniform(kb, (C_OUT,), jnp.float32, -bound, bound)
    g1 = jnp.ones((C_OUT,), jnp.float32)
    be1 = jnp.zeros((C_OUT,), jnp.float32)
    g2 = jnp.ones((C_OUT,), jnp.float32)
    be2 = jnp.zeros((C_OUT,), jnp.float32)

    out = model_forward(x, conv_w, conv_b, g1, be1, g2, be2)
    jax.block_until_ready(out)
    assert out.shape == (N, C_OUT, H_OUT, W_OUT), out.shape

    ref = _reference(x, conv_w, conv_b, g1, be1, g2, be2)
    assert jnp.allclose(out, ref, atol=2e-2, rtol=2e-2), float(jnp.max(jnp.abs(out - ref)))

    print("KERNEL_OK")
</pallas_src>

<mosaic_0001>
module attributes {stable_mosaic.version = 11 : i64} {
  func.func @_fused_kernel(%arg0: memref<16x128xf32, #tpu.memory_space<vmem>>, %arg1: memref<7x128x16xf32, #tpu.memory_space<vmem>>, %arg2: memref<8x16xf32, #tpu.memory_space<vmem>>, %arg3: memref<8x16xf32, #tpu.memory_space<vmem>>) attributes {dimension_semantics = [], scalar_prefetch = 0 : i64, scratch_operands = 0 : i64, tpu.core_type = #tpu.core_type<tc>} {
    %c0 = arith.constant 0 : index
    %c0_0 = arith.constant 0 : index
    %0 = vector.load %arg0[%c0, %c0_0] : memref<16x128xf32, #tpu.memory_space<vmem>>, vector<8x128xf32>
    %c0_1 = arith.constant 0 : index
    %c0_2 = arith.constant 0 : index
    %c0_3 = arith.constant 0 : index
    %1 = vector.load %arg1[%c0_1, %c0_2, %c0_3] : memref<7x128x16xf32, #tpu.memory_space<vmem>>, vector<1x128x16xf32>
    %2 = vector.shape_cast %1 : vector<1x128x16xf32> to vector<128x16xf32>
    %cst = arith.constant dense<0.000000e+00> : vector<8x16xf32>
    %3 = tpu.matmul %0, %2, %cst {dimension_numbers = #tpu.dot_dimension_numbers<[1], [0], [0], [1], [0, 0, 1, 1], [], []>} : vector<8x128xf32>, vector<128x16xf32>, vector<8x16xf32> -> vector<8x16xf32>
    %c1 = arith.constant 1 : index
    %c0_4 = arith.constant 0 : index
    %4 = vector.load %arg0[%c1, %c0_4] : memref<16x128xf32, #tpu.memory_space<vmem>>, vector<8x128xf32>
    %c1_5 = arith.constant 1 : index
    %c0_6 = arith.constant 0 : index
    %c0_7 = arith.constant 0 : index
    %5 = vector.load %arg1[%c1_5, %c0_6, %c0_7] : memref<7x128x16xf32, #tpu.memory_space<vmem>>, vector<1x128x16xf32>
    %6 = vector.shape_cast %5 : vector<1x128x16xf32> to vector<128x16xf32>
    %cst_8 = arith.constant dense<0.000000e+00> : vector<8x16xf32>
    %7 = tpu.matmul %4, %6, %cst_8 {dimension_numbers = #tpu.dot_dimension_numbers<[1], [0], [0], [1], [0, 0, 1, 1], [], []>} : vector<8x128xf32>, vector<128x16xf32>, vector<8x16xf32> -> vector<8x16xf32>
    %8 = arith.addf %3, %7 : vector<8x16xf32>
    %c2 = arith.constant 2 : index
    %c0_9 = arith.constant 0 : index
    %9 = vector.load %arg0[%c2, %c0_9] : memref<16x128xf32, #tpu.memory_space<vmem>>, vector<8x128xf32>
    %c2_10 = arith.constant 2 : index
    %c0_11 = arith.constant 0 : index
    %c0_12 = arith.constant 0 : index
    %10 = vector.load %arg1[%c2_10, %c0_11, %c0_12] : memref<7x128x16xf32, #tpu.memory_space<vmem>>, vector<1x128x16xf32>
    %11 = vector.shape_cast %10 : vector<1x128x16xf32> to vector<128x16xf32>
    %cst_13 = arith.constant dense<0.000000e+00> : vector<8x16xf32>
    %12 = tpu.matmul %9, %11, %cst_13 {dimension_numbers = #tpu.dot_dimension_numbers<[1], [0], [0], [1], [0, 0, 1, 1], [], []>} : vector<8x128xf32>, vector<128x16xf32>, vector<8x16xf32> -> vector<8x16xf32>
    %13 = arith.addf %8, %12 : vector<8x16xf32>
    %c3 = arith.constant 3 : index
    %c0_14 = arith.constant 0 : index
    %14 = vector.load %arg0[%c3, %c0_14] : memref<16x128xf32, #tpu.memory_space<vmem>>, vector<8x128xf32>
    %c3_15 = arith.constant 3 : index
    %c0_16 = arith.constant 0 : index
    %c0_17 = arith.constant 0 : index
    %15 = vector.load %arg1[%c3_15, %c0_16, %c0_17] : memref<7x128x16xf32, #tpu.memory_space<vmem>>, vector<1x128x16xf32>
    %16 = vector.shape_cast %15 : vector<1x128x16xf32> to vector<128x16xf32>
    %cst_18 = arith.constant dense<0.000000e+00> : vector<8x16xf32>
    %17 = tpu.matmul %14, %16, %cst_18 {dimension_numbers = #tpu.dot_dimension_numbers<[1], [0], [0], [1], [0, 0, 1, 1], [], []>} : vector<8x128xf32>, vector<128x16xf32>, vector<8x16xf32> -> vector<8x16xf32>
    %18 = arith.addf %13, %17 : vector<8x16xf32>
    %c4 = arith.constant 4 : index
    %c0_19 = arith.constant 0 : index
    %19 = vector.load %arg0[%c4, %c0_19] : memref<16x128xf32, #tpu.memory_space<vmem>>, vector<8x128xf32>
    %c4_20 = arith.constant 4 : index
    %c0_21 = arith.constant 0 : index
    %c0_22 = arith.constant 0 : index
    %20 = vector.load %arg1[%c4_20, %c0_21, %c0_22] : memref<7x128x16xf32, #tpu.memory_space<vmem>>, vector<1x128x16xf32>
    %21 = vector.shape_cast %20 : vector<1x128x16xf32> to vector<128x16xf32>
    %cst_23 = arith.constant dense<0.000000e+00> : vector<8x16xf32>
    %22 = tpu.matmul %19, %21, %cst_23 {dimension_numbers = #tpu.dot_dimension_numbers<[1], [0], [0], [1], [0, 0, 1, 1], [], []>} : vector<8x128xf32>, vector<128x16xf32>, vector<8x16xf32> -> vector<8x16xf32>
    %23 = arith.addf %18, %22 : vector<8x16xf32>
    %c5 = arith.constant 5 : index
    %c0_24 = arith.constant 0 : index
    %24 = vector.load %arg0[%c5, %c0_24] : memref<16x128xf32, #tpu.memory_space<vmem>>, vector<8x128xf32>
    %c5_25 = arith.constant 5 : index
    %c0_26 = arith.constant 0 : index
    %c0_27 = arith.constant 0 : index
    %25 = vector.load %arg1[%c5_25, %c0_26, %c0_27] : memref<7x128x16xf32, #tpu.memory_space<vmem>>, vector<1x128x16xf32>
    %26 = vector.shape_cast %25 : vector<1x128x16xf32> to vector<128x16xf32>
    %cst_28 = arith.constant dense<0.000000e+00> : vector<8x16xf32>
    %27 = tpu.matmul %24, %26, %cst_28 {dimension_numbers = #tpu.dot_dimension_numbers<[1], [0], [0], [1], [0, 0, 1, 1], [], []>} : vector<8x128xf32>, vector<128x16xf32>, vector<8x16xf32> -> vector<8x16xf32>
    %28 = arith.addf %23, %27 : vector<8x16xf32>
    %c6 = arith.constant 6 : index
    %c0_29 = arith.constant 0 : index
    %29 = vector.load %arg0[%c6, %c0_29] : memref<16x128xf32, #tpu.memory_space<vmem>>, vector<8x128xf32>
    %c6_30 = arith.constant 6 : index
    %c0_31 = arith.constant 0 : index
    %c0_32 = arith.constant 0 : index
    %30 = vector.load %arg1[%c6_30, %c0_31, %c0_32] : memref<7x128x16xf32, #tpu.memory_space<vmem>>, vector<1x128x16xf32>
    %31 = vector.shape_cast %30 : vector<1x128x16xf32> to vector<128x16xf32>
    %cst_33 = arith.constant dense<0.000000e+00> : vector<8x16xf32>
    %32 = tpu.matmul %29, %31, %cst_33 {dimension_numbers = #tpu.dot_dimension_numbers<[1], [0], [0], [1], [0, 0, 1, 1], [], []>} : vector<8x128xf32>, vector<128x16xf32>, vector<8x16xf32> -> vector<8x16xf32>
    %33 = arith.addf %28, %32 : vector<8x16xf32>
    %c0_34 = arith.constant 0 : index
    %c0_35 = arith.constant 0 : index
    %34 = vector.load %arg2[%c0_34, %c0_35] : memref<8x16xf32, #tpu.memory_space<vmem>>, vector<8x16xf32>
    %35 = vector.extract_strided_slice %34 {offsets = [0, 0], sizes = [1, 16], strides = [1, 1]} : vector<8x16xf32> to vector<1x16xf32>
    %36 = vector.extract_strided_slice %34 {offsets = [1, 0], sizes = [1, 16], strides = [1, 1]} : vector<8x16xf32> to vector<1x16xf32>
    %37 = vector.extract_strided_slice %34 {offsets = [3, 0], sizes = [1, 16], strides = [1, 1]} : vector<8x16xf32> to vector<1x16xf32>
    %38 = vector.extract_strided_slice %34 {offsets = [4, 0], sizes = [1, 16], strides = [1, 1]} : vector<8x16xf32> to vector<1x16xf32>
    %39 = vector.broadcast %35 : vector<1x16xf32> to vector<8x16xf32>
    %40 = arith.addf %33, %39 : vector<8x16xf32>
    %41 = vector.extract_strided_slice %40 {offsets = [0, 0], sizes = [7, 16], strides = [1, 1]} : vector<8x16xf32> to vector<7x16xf32>
    %cst_36 = arith.constant dense<0.000000e+00> : vector<16xf32>
    %42 = vector.multi_reduction <add>, %41, %cst_36 [0] : vector<7x16xf32> to vector<16xf32>
    %43 = vector.shape_cast %42 : vector<16xf32> to vector<1x16xf32>
    %cst_37 = arith.constant 0.142857149 : f32
    %44 = vector.broadcast %cst_37 : f32 to vector<1x16xf32>
    %45 = arith.mulf %43, %44 : vector<1x16xf32>
    %46 = vector.broadcast %45 : vector<1x16xf32> to vector<7x16xf32>
    %47 = arith.subf %41, %46 : vector<7x16xf32>
    %48 = arith.mulf %47, %47 : vector<7x16xf32>
    %cst_38 = arith.constant dense<0.000000e+00> : vector<16xf32>
    %49 = vector.multi_reduction <add>, %48, %cst_38 [0] : vector<7x16xf32> to vector<16xf32>
    %50 = vector.shape_cast %49 : vector<16xf32> to vector<1x16xf32>
    %cst_39 = arith.constant 0.142857149 : f32
    %51 = vector.broadcast %cst_39 : f32 to vector<1x16xf32>
    %52 = arith.mulf %50, %51 : vector<1x16xf32>
    %cst_40 = arith.constant 9.99999974E-6 : f32
    %53 = vector.broadcast %cst_40 : f32 to vector<1x16xf32>
    %54 = arith.addf %52, %53 : vector<1x16xf32>
    %55 = math.rsqrt %54 : vector<1x16xf32>
    %56 = arith.mulf %36, %36 : vector<1x16xf32>
    %57 = arith.mulf %56, %52 : vector<1x16xf32>
    %58 = arith.mulf %55, %55 : vector<1x16xf32>
    %59 = arith.mulf %57, %58 : vector<1x16xf32>
    %cst_41 = arith.constant 9.99999974E-6 : f32
    %60 = vector.broadcast %cst_41 : f32 to vector<1x16xf32>
    %61 = arith.addf %59, %60 : vector<1x16xf32>
    %62 = math.rsqrt %61 : vector<1x16xf32>
    %63 = arith.mulf %36, %37 : vector<1x16xf32>
    %64 = arith.mulf %63, %55 : vector<1x16xf32>
    %65 = arith.mulf %64, %62 : vector<1x16xf32>
    %cst_42 = arith.constant 1.000000e+00 : f32
    %66 = vector.broadcast %cst_42 : f32 to vector<1x16xf32>
    %67 = arith.addf %66, %65 : vector<1x16xf32>
    %68 = vector.broadcast %67 : vector<1x16xf32> to vector<8x16xf32>
    %69 = arith.mulf %40, %68 : vector<8x16xf32>
    %70 = arith.mulf %65, %45 : vector<1x16xf32>
    %71 = arith.subf %38, %70 : vector<1x16xf32>
    %72 = vector.broadcast %71 : vector<1x16xf32> to vector<8x16xf32>
    %73 = arith.addf %69, %72 : vector<8x16xf32>
    %c0_43 = arith.constant 0 : index
    %c0_44 = arith.constant 0 : index
    %74 = vector.load %arg3[%c0_43, %c0_44] : memref<8x16xf32, #tpu.memory_space<vmem>>, vector<8x16xf32>
    tpu.vector_store %arg3[%c0_43, %c0_44], %73 {strides = array<i32>} : memref<8x16xf32, #tpu.memory_space<vmem>>, vector<8x16xf32>,
    return
  }
}

</mosaic_0001>

<llo_original>
// kernel: model_forward.1
$region0: #{model_forward.1}
  #allocation0 [shape = 'u32[]', space=smem, size = 0x4, offset = 0x4, fixed_abs, tag = 'smem constant byte address 0x4 - core index']
  #allocation1 [shape = 'u32[72,128]{1,0:T(1,128)}', space=vmem, size = 0x9000, scoped, tag = 'internal scratch']
  %s0 = inlined_call_operand.vmem [shape: f32[16,128], index: 0, kind: input, shape index: {}]
  %s1 = inlined_call_operand.vmem [shape: f32[7,128,16], index: 1, kind: input, shape index: {}]
  %s2 = inlined_call_operand.vmem [shape: f32[8,16], index: 2, kind: input, shape index: {}]
  %s3 = inlined_call_operand.vmem [shape: f32[8,16], index: 3, kind: output, shape index: {}]
  %s4 = sld [smem:[#allocation0]]
  $region22: #{model_forward.1} parent=0
    _
  %s6 = ssub.s32 1, %s4
  %s7 = scalar_select 0, %s6, %s4
  // Predicated region
  $region2: #{model_forward.1} parent=0 // pred_check
    _
  $region3: #{model_forward.1} parent=0 // pred_check_branch
    %9 = sbr.rel (0) target = $region5
  $region4: #{model_forward.1} parent=0 // pred_region
    _
  $region5: #{model_forward.1} parent=0 // pred_fallthru
    _
  // Predicated region
  $region6: #{model_forward.1} parent=0 // pred_check
    _
  $region7: #{model_forward.1} parent=0 // pred_check_branch
    %11 = sbr.rel (0) target = $region9
  $region8: #{model_forward.1} parent=0 // pred_region
    _
  $region9: #{model_forward.1} parent=0 // pred_fallthru
    _
  // Predicated region
  $region10: #{model_forward.1} parent=0 // pred_check
    _
  $region11: #{model_forward.1} parent=0 // pred_check_branch
    %13 = sbr.rel (0) target = $region13
  $region12: #{model_forward.1} parent=0 // pred_region
    _
  $region13: #{model_forward.1} parent=0 // pred_fallthru
    _
  %v14 = vld [vmem:[%s0] sm:$0xff]
  %v15 = vld [vmem:[%s1] sm:$0xff]
  %v16 = vld [vmem:[%s1 + $0x8] sm:$0xff]
  %v17 = vld [vmem:[%s1 + $0x10] sm:$0xff]
  %v18 = vld [vmem:[%s1 + $0x18] sm:$0xff]
  %v19 = vld [vmem:[%s1 + $0x20] sm:$0xff]
  %v20 = vld [vmem:[%s1 + $0x28] sm:$0xff]
  %v21 = vld [vmem:[%s1 + $0x30] sm:$0xff]
  %v22 = vld [vmem:[%s1 + $0x38] sm:$0xff]
  %v23 = vld [vmem:[%s1 + $0x40] sm:$0xff]
  %v24 = vld [vmem:[%s1 + $0x48] sm:$0xff]
  %v25 = vld [vmem:[%s1 + $0x50] sm:$0xff]
  %v26 = vld [vmem:[%s1 + $0x58] sm:$0xff]
  %v27 = vld [vmem:[%s1 + $0x60] sm:$0xff]
  %v28 = vld [vmem:[%s1 + $0x68] sm:$0xff]
  %v29 = vld [vmem:[%s1 + $0x70] sm:$0xff]
  %v30 = vld [vmem:[%s1 + $0x78] sm:$0xff]
  %v31 = vld [vmem:[%s0 + $0x1] sm:$0xff]
  %s32 = scalar_lea.vmem %s1, 128
  %v33 = vld [vmem:[%s32] sm:$0xff]
  %v34 = vld [vmem:[%s32 + $0x8] sm:$0xff]
  %v35 = vld [vmem:[%s32 + $0x10] sm:$0xff]
  %v36 = vld [vmem:[%s32 + $0x18] sm:$0xff]
  %v37 = vld [vmem:[%s32 + $0x20] sm:$0xff]
  %v38 = vld [vmem:[%s32 + $0x28] sm:$0xff]
  %v39 = vld [vmem:[%s32 + $0x30] sm:$0xff]
  %v40 = vld [vmem:[%s32 + $0x38] sm:$0xff]
  %v41 = vld [vmem:[%s32 + $0x40] sm:$0xff]
  %v42 = vld [vmem:[%s32 + $0x48] sm:$0xff]
  %v43 = vld [vmem:[%s32 + $0x50] sm:$0xff]
  %v44 = vld [vmem:[%s32 + $0x58] sm:$0xff]
  %v45 = vld [vmem:[%s32 + $0x60] sm:$0xff]
  %v46 = vld [vmem:[%s32 + $0x68] sm:$0xff]
  %v47 = vld [vmem:[%s32 + $0x70] sm:$0xff]
  %v48 = vld [vmem:[%s32 + $0x78] sm:$0xff]
  %49 = vmatpush.msra.mxu0 %v48
  %50 = vmatpush.msra.mxu0 %v47
  %51 = vmatpush.msra.mxu0 %v46
  %52 = vmatpush.msra.mxu0 %v45
  %53 = vmatpush.msra.mxu0 %v44
  %54 = vmatpush.msra.mxu0 %v43
  %55 = vmatpush.msra.mxu0 %v42
  %56 = vmatpush.msra.mxu0 %v41
  %57 = vmatpush.msra.mxu0 %v40
  %58 = vmatpush.msra.mxu0 %v39
  %59 = vmatpush.msra.mxu0 %v38
  %60 = vmatpush.msra.mxu0 %v37
  %61 = vmatpush.msra.mxu0 %v36
  %62 = vmatpush.msra.mxu0 %v35
  %63 = vmatpush.msra.mxu0 %v34
  %64 = vmatpush.msra.mxu0 %v33
  %65 = vmatmul.f32.gmra.mxu0 %v31
  %v66 = vpop.f32.mrf.mxu0
  %v67 = vadd.f32 0.0, %v66
  %68 = vdwg.mxu0
  %69 = vmatpush.msra.mxu0 %v30
  %70 = vmatpush.msra.mxu0 %v29
  %71 = vmatpush.msra.mxu0 %v28
  %72 = vmatpush.msra.mxu0 %v27
  %73 = vmatpush.msra.mxu0 %v26
  %74 = vmatpush.msra.mxu0 %v25
  %75 = vmatpush.msra.mxu0 %v24
  %76 = vmatpush.msra.mxu0 %v23
  %77 = vmatpush.msra.mxu0 %v22
  %78 = vmatpush.msra.mxu0 %v21
  %79 = vmatpush.msra.mxu0 %v20
  %80 = vmatpush.msra.mxu0 %v19
  %81 = vmatpush.msra.mxu0 %v18
  %82 = vmatpush.msra.mxu0 %v17
  %83 = vmatpush.msra.mxu0 %v16
  %84 = vmatpush.msra.mxu0 %v15
  %85 = vmatmul.f32.gmra.mxu0 %v14
  %v86 = vpop.f32.mrf.mxu0
  %v87 = vadd.f32 %v67, %v86
  %88 = vdwg.mxu0
  %v89 = vld [vmem:[%s0 + $0x2] sm:$0xff]
  %s90 = scalar_lea.vmem %s1, 256
  %v91 = vld [vmem:[%s90] sm:$0xff]
  %v92 = vld [vmem:[%s90 + $0x8] sm:$0xff]
  %v93 = vld [vmem:[%s90 + $0x10] sm:$0xff]
  %v94 = vld [vmem:[%s90 + $0x18] sm:$0xff]
  %v95 = vld [vmem:[%s90 + $0x20] sm:$0xff]
  %v96 = vld [vmem:[%s90 + $0x28] sm:$0xff]
  %v97 = vld [vmem:[%s90 + $0x30] sm:$0xff]
  %v98 = vld [vmem:[%s90 + $0x38] sm:$0xff]
  %v99 = vld [vmem:[%s90 + $0x40] sm:$0xff]
  %v100 = vld [vmem:[%s90 + $0x48] sm:$0xff]
  %v101 = vld [vmem:[%s90 + $0x50] sm:$0xff]
  %v102 = vld [vmem:[%s90 + $0x58] sm:$0xff]
  %v103 = vld [vmem:[%s90 + $0x60] sm:$0xff]
  %v104 = vld [vmem:[%s90 + $0x68] sm:$0xff]
  %v105 = vld [vmem:[%s90 + $0x70] sm:$0xff]
  %v106 = vld [vmem:[%s90 + $0x78] sm:$0xff]
  %107 = vmatpush.msra.mxu0 %v106
  %108 = vmatpush.msra.mxu0 %v105
  %109 = vmatpush.msra.mxu0 %v104
  %110 = vmatpush.msra.mxu0 %v103
  %111 = vmatpush.msra.mxu0 %v102
  %112 = vmatpush.msra.mxu0 %v101
  %113 = vmatpush.msra.mxu0 %v100
  %114 = vmatpush.msra.mxu0 %v99
  %115 = vmatpush.msra.mxu0 %v98
  %116 = vmatpush.msra.mxu0 %v97
  %117 = vmatpush.msra.mxu0 %v96
  %118 = vmatpush.msra.mxu0 %v95
  %119 = vmatpush.msra.mxu0 %v94
  %120 = vmatpush.msra.mxu0 %v93
  %121 = vmatpush.msra.mxu0 %v92
  %122 = vmatpush.msra.mxu0 %v91
  %123 = vmatmul.f32.gmra.mxu0 %v89
  %v124 = vpop.f32.mrf.mxu0
  %v125 = vadd.f32 0.0, %v124
  %126 = vdwg.mxu0
  %v127 = vadd.f32 %v87, %v125
  %v128 = vld [vmem:[%s0 + $0x3] sm:$0xff]
  %s129 = scalar_lea.vmem %s1, 384
  %v130 = vld [vmem:[%s129] sm:$0xff]
  %v131 = vld [vmem:[%s129 + $0x8] sm:$0xff]
  %v132 = vld [vmem:[%s129 + $0x10] sm:$0xff]
  %v133 = vld [vmem:[%s129 + $0x18] sm:$0xff]
  %v134 = vld [vmem:[%s129 + $0x20] sm:$0xff]
  %v135 = vld [vmem:[%s129 + $0x28] sm:$0xff]
  %v136 = vld [vmem:[%s129 + $0x30] sm:$0xff]
  %v137 = vld [vmem:[%s129 + $0x38] sm:$0xff]
  %v138 = vld [vmem:[%s129 + $0x40] sm:$0xff]
  %v139 = vld [vmem:[%s129 + $0x48] sm:$0xff]
  %v140 = vld [vmem:[%s129 + $0x50] sm:$0xff]
  %v141 = vld [vmem:[%s129 + $0x58] sm:$0xff]
  %v142 = vld [vmem:[%s129 + $0x60] sm:$0xff]
  %v143 = vld [vmem:[%s129 + $0x68] sm:$0xff]
  %v144 = vld [vmem:[%s129 + $0x70] sm:$0xff]
  %v145 = vld [vmem:[%s129 + $0x78] sm:$0xff]
  %146 = vmatpush.msra.mxu0 %v145
  %147 = vmatpush.msra.mxu0 %v144
  %148 = vmatpush.msra.mxu0 %v143
  %149 = vmatpush.msra.mxu0 %v142
  %150 = vmatpush.msra.mxu0 %v141
  %151 = vmatpush.msra.mxu0 %v140
  %152 = vmatpush.msra.mxu0 %v139
  %153 = vmatpush.msra.mxu0 %v138
  %154 = vmatpush.msra.mxu0 %v137
  %155 = vmatpush.msra.mxu0 %v136
  %156 = vmatpush.msra.mxu0 %v135
  %157 = vmatpush.msra.mxu0 %v134
  %158 = vmatpush.msra.mxu0 %v133
  %159 = vmatpush.msra.mxu0 %v132
  %160 = vmatpush.msra.mxu0 %v131
  %161 = vmatpush.msra.mxu0 %v130
  %162 = vmatmul.f32.gmra.mxu0 %v128
  %v163 = vpop.f32.mrf.mxu0
  %v164 = vadd.f32 0.0, %v163
  %165 = vdwg.mxu0
  %v166 = vadd.f32 %v127, %v164
  %v167 = vld [vmem:[%s0 + $0x4] sm:$0xff]
  %s168 = scalar_lea.vmem %s1, 512
  %v169 = vld [vmem:[%s168] sm:$0xff]
  %v170 = vld [vmem:[%s168 + $0x8] sm:$0xff]
  %v171 = vld [vmem:[%s168 + $0x10] sm:$0xff]
  %v172 = vld [vmem:[%s168 + $0x18] sm:$0xff]
  %v173 = vld [vmem:[%s168 + $0x20] sm:$0xff]
  %v174 = vld [vmem:[%s168 + $0x28] sm:$0xff]
  %v175 = vld [vmem:[%s168 + $0x30] sm:$0xff]
  %v176 = vld [vmem:[%s168 + $0x38] sm:$0xff]
  %v177 = vld [vmem:[%s168 + $0x40] sm:$0xff]
  %v178 = vld [vmem:[%s168 + $0x48] sm:$0xff]
  %v179 = vld [vmem:[%s168 + $0x50] sm:$0xff]
  %v180 = vld [vmem:[%s168 + $0x58] sm:$0xff]
  %v181 = vld [vmem:[%s168 + $0x60] sm:$0xff]
  %v182 = vld [vmem:[%s168 + $0x68] sm:$0xff]
  %v183 = vld [vmem:[%s168 + $0x70] sm:$0xff]
  %v184 = vld [vmem:[%s168 + $0x78] sm:$0xff]
  %185 = vmatpush.msra.mxu0 %v184
  %186 = vmatpush.msra.mxu0 %v183
  %187 = vmatpush.msra.mxu0 %v182
  %188 = vmatpush.msra.mxu0 %v181
  %189 = vmatpush.msra.mxu0 %v180
  %190 = vmatpush.msra.mxu0 %v179
  %191 = vmatpush.msra.mxu0 %v178
  %192 = vmatpush.msra.mxu0 %v177
  %193 = vmatpush.msra.mxu0 %v176
  %194 = vmatpush.msra.mxu0 %v175
  %195 = vmatpush.msra.mxu0 %v174
  %196 = vmatpush.msra.mxu0 %v173
  %197 = vmatpush.msra.mxu0 %v172
  %198 = vmatpush.msra.mxu0 %v171
  %199 = vmatpush.msra.mxu0 %v170
  %200 = vmatpush.msra.mxu0 %v169
  %201 = vmatmul.f32.gmra.mxu0 %v167
  %v202 = vpop.f32.mrf.mxu0
  %v203 = vadd.f32 0.0, %v202
  %204 = vdwg.mxu0
  %v205 = vadd.f32 %v166, %v203
  %v206 = vld [vmem:[%s0 + $0x5] sm:$0xff]
  %s207 = scalar_lea.vmem %s1, 640
  %v208 = vld [vmem:[%s207] sm:$0xff]
  %v209 = vld [vmem:[%s207 + $0x8] sm:$0xff]
  %v210 = vld [vmem:[%s207 + $0x10] sm:$0xff]
  %v211 = vld [vmem:[%s207 + $0x18] sm:$0xff]
  %v212 = vld [vmem:[%s207 + $0x20] sm:$0xff]
  %v213 = vld [vmem:[%s207 + $0x28] sm:$0xff]
  %v214 = vld [vmem:[%s207 + $0x30] sm:$0xff]
  %v215 = vld [vmem:[%s207 + $0x38] sm:$0xff]
  %v216 = vld [vmem:[%s207 + $0x40] sm:$0xff]
  %v217 = vld [vmem:[%s207 + $0x48] sm:$0xff]
  %v218 = vld [vmem:[%s207 + $0x50] sm:$0xff]
  %v219 = vld [vmem:[%s207 + $0x58] sm:$0xff]
  %v220 = vld [vmem:[%s207 + $0x60] sm:$0xff]
  %v221 = vld [vmem:[%s207 + $0x68] sm:$0xff]
  %v222 = vld [vmem:[%s207 + $0x70] sm:$0xff]
  %v223 = vld [vmem:[%s207 + $0x78] sm:$0xff]
  %224 = vmatpush.msra.mxu0 %v223
  %225 = vmatpush.msra.mxu0 %v222
  %226 = vmatpush.msra.mxu0 %v221
  %227 = vmatpush.msra.mxu0 %v220
  %228 = vmatpush.msra.mxu0 %v219
  %229 = vmatpush.msra.mxu0 %v218
  %230 = vmatpush.msra.mxu0 %v217
  %231 = vmatpush.msra.mxu0 %v216
  %232 = vmatpush.msra.mxu0 %v215
  %233 = vmatpush.msra.mxu0 %v214
  %234 = vmatpush.msra.mxu0 %v213
  %235 = vmatpush.msra.mxu0 %v212
  %236 = vmatpush.msra.mxu0 %v211
  %237 = vmatpush.msra.mxu0 %v210
  %238 = vmatpush.msra.mxu0 %v209
  %239 = vmatpush.msra.mxu0 %v208
  %240 = vmatmul.f32.gmra.mxu0 %v206
  %v241 = vpop.f32.mrf.mxu0
  %v242 = vadd.f32 0.0, %v241
  %243 = vdwg.mxu0
  %v244 = vadd.f32 %v205, %v242
  %v245 = vld [vmem:[%s0 + $0x6] sm:$0xff]
  %s246 = scalar_lea.vmem %s1, 768
  %v247 = vld [vmem:[%s246] sm:$0xff]
  %v248 = vld [vmem:[%s246 + $0x8] sm:$0xff]
  %v249 = vld [vmem:[%s246 + $0x10] sm:$0xff]
  %v250 = vld [vmem:[%s246 + $0x18] sm:$0xff]
  %v251 = vld [vmem:[%s246 + $0x20] sm:$0xff]
  %v252 = vld [vmem:[%s246 + $0x28] sm:$0xff]
  %v253 = vld [vmem:[%s246 + $0x30] sm:$0xff]
  %v254 = vld [vmem:[%s246 + $0x38] sm:$0xff]
  %v255 = vld [vmem:[%s246 + $0x40] sm:$0xff]
  %v256 = vld [vmem:[%s246 + $0x48] sm:$0xff]
  %v257 = vld [vmem:[%s246 + $0x50] sm:$0xff]
  %v258 = vld [vmem:[%s246 + $0x58] sm:$0xff]
  %v259 = vld [vmem:[%s246 + $0x60] sm:$0xff]
  %v260 = vld [vmem:[%s246 + $0x68] sm:$0xff]
  %v261 = vld [vmem:[%s246 + $0x70] sm:$0xff]
  %v262 = vld [vmem:[%s246 + $0x78] sm:$0xff]
  %263 = vmatpush.msra.mxu0 %v262
  %264 = vmatpush.msra.mxu0 %v261
  %265 = vmatpush.msra.mxu0 %v260
  %266 = vmatpush.msra.mxu0 %v259
  %267 = vmatpush.msra.mxu0 %v258
  %268 = vmatpush.msra.mxu0 %v257
  %269 = vmatpush.msra.mxu0 %v256
  %270 = vmatpush.msra.mxu0 %v255
  %271 = vmatpush.msra.mxu0 %v254
  %272 = vmatpush.msra.mxu0 %v253
  %273 = vmatpush.msra.mxu0 %v252
  %274 = vmatpush.msra.mxu0 %v251
  %275 = vmatpush.msra.mxu0 %v250
  %276 = vmatpush.msra.mxu0 %v249
  %277 = vmatpush.msra.mxu0 %v248
  %278 = vmatpush.msra.mxu0 %v247
  %279 = vmatmul.f32.gmra.mxu0 %v245
  %v280 = vpop.f32.mrf.mxu0
  %v281 = vadd.f32 0.0, %v280
  %282 = vdwg.mxu0
  %v283 = vadd.f32 %v244, %v281
  %v284 = vld [vmem:[%s2] sm:$0xff]
  %v285 = vperm.slane %v284, 0
  %v286 = vadd.f32 %v283, %v285
  %vm287 = vcmask 129024
  %v288 = vsel %vm287, %v286, 0.0
  %v289 = vrot.slane %v288, 4
  %v290 = vadd.f32 %v288, %v289
  %v291 = vrot.slane %v290, 2
  %v292 = vadd.f32 %v290, %v291
  %v293 = vrot.slane %v292, 1
  %v294 = vadd.f32 %v292, %v293
  %v295 = vmul.f32 %v294, 0.14285715
  %v296 = vsub.f32 %v286, %v295
  %v297 = vmul.f32 %v296, %v296
  %v298 = vsel %vm287, %v297, 0.0
  %v299 = vrot.slane %v298, 4
  %v300 = vadd.f32 %v298, %v299
  %v301 = vrot.slane %v300, 2
  %v302 = vadd.f32 %v300, %v301
  %v303 = vrot.slane %v302, 1
  %v304 = vadd.f32 %v302, %v303
  %v305 = vmul.f32 %v304, 0.14285715
  %v306 = vadd.f32 %v305, 1e-05
  %v307 = vrsqrt.pop %v306
  %v308 = vmul.f32 %v307, %v306
  %v309 = vmul.f32 %v308, %v307
  %v310 = vmul.f32 0.5, %v309
  %v311 = vsub.f32 1.5, %v310
  %v312 = vmul.f32 %v307, %v311
  %vm313 = vweird.f32 %v306
  %vm314 = vweird.f32 %v307
  %vm315 = vmor %vm313, %vm314
  %v316 = vsel %vm315, %v307, %v312
  %v317 = vmul.f32 %v284, %v284
  %v318 = vmul.f32 %v317, %v305
  %v319 = vmul.f32 %v316, %v316
  %v320 = vmul.f32 %v318, %v319
  %v321 = vadd.f32 %v320, 1e-05
  %v322 = vrsqrt.pop %v321
  %v323 = vmul.f32 %v322, %v321
  %v324 = vmul.f32 %v323, %v322
  %v325 = vmul.f32 0.5, %v324
  %v326 = vsub.f32 1.5, %v325
  %v327 = vmul.f32 %v322, %v326
  %vm328 = vweird.f32 %v321
  %vm329 = vweird.f32 %v322
  %vm330 = vmor %vm328, %vm329
  %v331 = vsel %vm330, %v322, %v327
  %v333 = vrot.slane %v284, 2
  %v335 = vmul.f32 %v284, %v333
  %v336 = vmul.f32 %v335, %v316
  %v337 = vmul.f32 %v336, %v331
  %v338 = vadd.f32 %v337, 1.0
  %v339 = vperm.slane %v338, 1
  %v340 = vmul.f32 %v286, %v339
  %v341 = vmul.f32 %v337, %v295
  %v343 = vrot.slane %v341, 5
  %v345 = vsub.f32 %v284, %v343
  %v346 = vperm.slane %v345, 4
  %v347 = vadd.f32 %v340, %v346
  %vm348 = vcmask 130048
  %349 = vst.msk [vmem:[%s3] sm:$0xff] %vm348, %v347
  // Predicated region
  $region14: #{model_forward.1} parent=0 // pred_check
    _
  $region15: #{model_forward.1} parent=0 // pred_check_branch
    %351 = sbr.rel (0) target = $region17
  $region16: #{model_forward.1} parent=0 // pred_region
    _
  $region17: #{model_forward.1} parent=0 // pred_fallthru
    _
  // Predicated region
  $region18: #{model_forward.1} parent=0 // pred_check
    _
  $region19: #{model_forward.1} parent=0 // pred_check_branch
    %353 = sbr.rel (0) target = $region21
  $region20: #{model_forward.1} parent=0 // pred_region
    _
  $region21: #{model_forward.1} parent=0 // pred_fallthru
    _

</llo_original>
